<compile_context>
chip_gen: v6e
topology: v6e:2x2x1
jax: 0.10.0
libtpu: 0.0.40
codegen_flags: <defaults>
</compile_context>

<pallas_src>
import jax
import jax.numpy as jnp
import numpy as np
from jax.experimental import pallas as pl
from jax.experimental.pallas import tpu as pltpu


def gcn_layer_kernel(adj_ref, x_ref, w_ref, b_ref, o_ref, acc_ref):
    """Grid: (row_tiles, k_tiles).  acc_ref accumulates A_tile @ X_tile in f32."""
    k = pl.program_id(1)

    @pl.when(k == 0)
    def _init():
        acc_ref[...] = jnp.zeros_like(acc_ref)

    # Aggregation partial-sum over the source-node (reduction) axis.
    acc_ref[...] += jnp.dot(adj_ref[...], x_ref[...],
                            preferred_element_type=jnp.float32)

    @pl.when(k == pl.num_programs(1) - 1)
    def _finalize():
        # Linear layer + bias only once per output row-tile (not per K step).
        out = jnp.dot(acc_ref[...], w_ref[...],
                      preferred_element_type=jnp.float32)
        o_ref[...] = (out + b_ref[...]).astype(o_ref.dtype)


def _round_up(x, m):
    return (x + m - 1) // m * m


def gcn_layer(adj, x, weight, bias, *, tm=256, tk=512):
    """adj: (N, N) dense adjacency with A[dst, src]=1 for edge src->dst.
    x: (N, in_feats).  weight: (out_feats, in_feats) [PyTorch nn.Linear layout].
    bias: (out_feats,).  Returns (N, out_feats) float32."""
    N, in_feats = x.shape
    out_feats = weight.shape[0]

    # Lane-dense feature dims (multiples of 128) -> unmasked vector stores.
    in_p = _round_up(in_feats, 128)
    out_p = _round_up(out_feats, 128)

    # Tile sizes: dst rows (sublane axis, multiple of 8); src/reduction cols
    # (lane axis, multiple of 128).  Clamp to the (padded) problem size.
    TM = min(tm, _round_up(N, 8))
    TK = min(tk, _round_up(N, 128))
    n_rows = _round_up(N, TM)
    n_cols = _round_up(N, TK)

    f32 = jnp.float32
    adj_p = jnp.zeros((n_rows, n_cols), f32).at[:N, :N].set(adj.astype(f32))
    x_p = jnp.zeros((n_cols, in_p), f32).at[:N, :in_feats].set(x.astype(f32))
    w_p = jnp.zeros((in_p, out_p), f32).at[:in_feats, :out_feats].set(
        weight.T.astype(f32))
    b_p = jnp.zeros((1, out_p), f32).at[0, :out_feats].set(bias.astype(f32))

    grid = (n_rows // TM, n_cols // TK)

    # Double-buffered A/X tiles + resident W, bias, acc, output (bytes, f32).
    vmem_bytes = 4 * (2 * TM * TK + 2 * TK * in_p + in_p * out_p
                      + 2 * out_p + TM * in_p + 2 * TM * out_p)
    # Explicit limit with headroom; capped well under v7x's 64 MiB physical VMEM.
    vmem_limit = int(min(max(2 * vmem_bytes, 16 * 1024 * 1024),
                         48 * 1024 * 1024))

    out_padded = pl.pallas_call(
        gcn_layer_kernel,
        out_shape=jax.ShapeDtypeStruct((n_rows, out_p), f32),
        grid_spec=pltpu.PrefetchScalarGridSpec(
            num_scalar_prefetch=0,
            grid=grid,
            in_specs=[
                pl.BlockSpec((TM, TK), lambda i, k: (i, k)),        # A tile
                pl.BlockSpec((TK, in_p), lambda i, k: (k, 0)),      # X tile
                pl.BlockSpec((in_p, out_p), lambda i, k: (0, 0)),   # W^T (resident)
                pl.BlockSpec((1, out_p), lambda i, k: (0, 0)),      # bias (resident)
            ],
            out_specs=pl.BlockSpec((TM, out_p), lambda i, k: (i, 0)),
            scratch_shapes=[pltpu.VMEM((TM, in_p), f32)],
        ),
        compiler_params=pltpu.CompilerParams(
            dimension_semantics=("parallel", "arbitrary"),
            vmem_limit_bytes=vmem_limit,
        ),
    )(adj_p, x_p, w_p, b_p)

    return out_padded[:N, :out_feats]


if __name__ == "__main__":
    key = jax.random.PRNGKey(0)
    k_adj, k_x, k_w, k_b = jax.random.split(key, 4)

    # Small synthetic graph / layer sizes.
    N = 16
    in_feats = 32
    out_feats = 32

    # Random directed graph as dense adjacency (A[dst, src] = 1 for edge src->dst).
    adj = (jax.random.uniform(k_adj, (N, N)) < 0.3).astype(jnp.float32)

    # Node features.
    x = jax.random.normal(k_x, (N, in_feats), dtype=jnp.float32)

    # Deterministic nn.Linear-style parameters (synthetic, not a checkpoint load).
    bound = 1.0 / np.sqrt(in_feats)
    weight = jax.random.uniform(k_w, (out_feats, in_feats),
                                minval=-bound, maxval=bound, dtype=jnp.float32)
    bias = jax.random.uniform(k_b, (out_feats,),
                              minval=-bound, maxval=bound, dtype=jnp.float32)

    out = gcn_layer(adj, x, weight, bias)
    out = jax.block_until_ready(out)

    # Pure-JAX reference of the same math.
    ref = (adj @ x) @ weight.T + bias
    assert out.shape == (N, out_feats)
    assert np.allclose(np.asarray(out), np.asarray(ref), rtol=1e-5, atol=1e-5)

    print("KERNEL_OK")
</pallas_src>

<mosaic_0001>
module attributes {stable_mosaic.version = 11 : i64} {
  func.func @gcn_layer_kernel(%arg0: i32, %arg1: i32, %arg2: memref<16x128xf32, #tpu.memory_space<vmem>>, %arg3: memref<128x128xf32, #tpu.memory_space<vmem>>, %arg4: memref<128x128xf32, #tpu.memory_space<vmem>>, %arg5: memref<1x128xf32, #tpu.memory_space<vmem>>, %arg6: memref<16x128xf32, #tpu.memory_space<vmem>>, %arg7: memref<16x128xf32, #tpu.memory_space<vmem>>) attributes {dimension_semantics = [#tpu.dimension_semantics<parallel>, #tpu.dimension_semantics<arbitrary>], iteration_bounds = array<i64: 1, 1>, scalar_prefetch = 0 : i64, scratch_operands = 1 : i64, tpu.core_type = #tpu.core_type<tc>, window_params = [{transform_indices = @transform_0, window_bounds = array<i64: 16, 128>}, {transform_indices = @transform_1, window_bounds = array<i64: 128, 128>}, {pipeline_mode = #tpu.pipeline_mode<synchronous>, transform_indices = @transform_2, window_bounds = array<i64: 128, 128>}, {pipeline_mode = #tpu.pipeline_mode<synchronous>, transform_indices = @transform_3, window_bounds = array<i64: 1, 128>}, {transform_indices = @transform_4, window_bounds = array<i64: 16, 128>}]} {
    %c0_i32 = arith.constant 0 : i32
    %0 = arith.cmpi eq, %arg1, %c0_i32 : i32
    %1 = arith.extui %0 : i1 to i32
    %c0_i32_0 = arith.constant 0 : i32
    %2 = arith.cmpi ne, %1, %c0_i32_0 : i32
    scf.if %2 {
      %cst_10 = arith.constant 0.000000e+00 : f32
      %12 = vector.broadcast %cst_10 : f32 to vector<16x128xf32>
      %c0_11 = arith.constant 0 : index
      %c0_12 = arith.constant 0 : index
      %13 = vector.load %arg7[%c0_11, %c0_12] : memref<16x128xf32, #tpu.memory_space<vmem>>, vector<16x128xf32>
      tpu.vector_store %arg7[%c0_11, %c0_12], %12 {strides = array<i32>} : memref<16x128xf32, #tpu.memory_space<vmem>>, vector<16x128xf32>,
    } else {
    }
    %c0 = arith.constant 0 : index
    %c0_1 = arith.constant 0 : index
    %3 = vector.load %arg7[%c0, %c0_1] : memref<16x128xf32, #tpu.memory_space<vmem>>, vector<16x128xf32>
    %c0_2 = arith.constant 0 : index
    %c0_3 = arith.constant 0 : index
    %4 = vector.load %arg2[%c0_2, %c0_3] : memref<16x128xf32, #tpu.memory_space<vmem>>, vector<16x128xf32>
    %c0_4 = arith.constant 0 : index
    %c0_5 = arith.constant 0 : index
    %5 = vector.load %arg3[%c0_4, %c0_5] : memref<128x128xf32, #tpu.memory_space<vmem>>, vector<128x128xf32>
    %cst = arith.constant dense<0.000000e+00> : vector<16x128xf32>
    %6 = tpu.matmul %4, %5, %cst {dimension_numbers = #tpu.dot_dimension_numbers<[1], [0], [0], [1], [0, 0, 1, 1], [], []>} : vector<16x128xf32>, vector<128x128xf32>, vector<16x128xf32> -> vector<16x128xf32>
    %7 = arith.addf %3, %6 : vector<16x128xf32>
    %c0_6 = arith.constant 0 : index
    %c0_7 = arith.constant 0 : index
    %8 = vector.load %arg7[%c0_6, %c0_7] : memref<16x128xf32, #tpu.memory_space<vmem>>, vector<16x128xf32>
    tpu.vector_store %arg7[%c0_6, %c0_7], %7 {strides = array<i32>} : memref<16x128xf32, #tpu.memory_space<vmem>>, vector<16x128xf32>,
    %c0_i32_8 = arith.constant 0 : i32
    %9 = arith.cmpi eq, %arg1, %c0_i32_8 : i32
    %10 = arith.extui %9 : i1 to i32
    %c0_i32_9 = arith.constant 0 : i32
    %11 = arith.cmpi ne, %10, %c0_i32_9 : i32
    scf.if %11 {
      %c0_10 = arith.constant 0 : index
      %c0_11 = arith.constant 0 : index
      %12 = vector.load %arg7[%c0_10, %c0_11] : memref<16x128xf32, #tpu.memory_space<vmem>>, vector<16x128xf32>
      %c0_12 = arith.constant 0 : index
      %c0_13 = arith.constant 0 : index
      %13 = vector.load %arg4[%c0_12, %c0_13] : memref<128x128xf32, #tpu.memory_space<vmem>>, vector<128x128xf32>
      %cst_14 = arith.constant dense<0.000000e+00> : vector<16x128xf32>
      %14 = tpu.matmul %12, %13, %cst_14 {dimension_numbers = #tpu.dot_dimension_numbers<[1], [0], [0], [1], [0, 0, 1, 1], [], []>} : vector<16x128xf32>, vector<128x128xf32>, vector<16x128xf32> -> vector<16x128xf32>
      %c0_15 = arith.constant 0 : index
      %c0_16 = arith.constant 0 : index
      %15 = vector.load %arg5[%c0_15, %c0_16] : memref<1x128xf32, #tpu.memory_space<vmem>>, vector<1x128xf32>
      %16 = vector.broadcast %15 : vector<1x128xf32> to vector<16x128xf32>
      %17 = arith.addf %14, %16 : vector<16x128xf32>
      %c0_17 = arith.constant 0 : index
      %c0_18 = arith.constant 0 : index
      %18 = vector.load %arg6[%c0_17, %c0_18] : memref<16x128xf32, #tpu.memory_space<vmem>>, vector<16x128xf32>
      tpu.vector_store %arg6[%c0_17, %c0_18], %17 {strides = array<i32>} : memref<16x128xf32, #tpu.memory_space<vmem>>, vector<16x128xf32>,
    } else {
    }
    return
  }
  func.func @transform_0(%arg0: i32, %arg1: i32) -> (i32, i32) {
    %c0_i32 = arith.constant 0 : i32
    return %arg0, %arg1 : i32, i32
  }
  func.func @transform_1(%arg0: i32, %arg1: i32) -> (i32, i32) {
    %c0_i32 = arith.constant 0 : i32
    %c0_i32_0 = arith.constant 0 : i32
    return %arg1, %c0_i32 : i32, i32
  }
  func.func @transform_2(%arg0: i32, %arg1: i32) -> (i32, i32) {
    %c0_i32 = arith.constant 0 : i32
    %c0_i32_0 = arith.constant 0 : i32
    %c0_i32_1 = arith.constant 0 : i32
    return %c0_i32, %c0_i32_0 : i32, i32
  }
  func.func @transform_3(%arg0: i32, %arg1: i32) -> (i32, i32) {
    %c0_i32 = arith.constant 0 : i32
    %c0_i32_0 = arith.constant 0 : i32
    %c0_i32_1 = arith.constant 0 : i32
    return %c0_i32, %c0_i32_0 : i32, i32
  }
  func.func @transform_4(%arg0: i32, %arg1: i32) -> (i32, i32) {
    %c0_i32 = arith.constant 0 : i32
    %c0_i32_0 = arith.constant 0 : i32
    return %arg0, %c0_i32 : i32, i32
  }
}

</mosaic_0001>

<llo_original>
// kernel: tpu_custom_call.1
$region0: #{tpu_custom_call.1}
  #allocation0 [shape = 'u32[]', space=smem, size = 0x4, offset = 0x4, fixed_abs, tag = 'smem constant byte address 0x4 - core index']
  #allocation1 [shape = 'u32[144,128]{1,0:T(1,128)}', space=vmem, size = 0x12000, scoped, tag = 'internal scratch']
  #allocation2 [shape = 'f32[16,128]{1,0:T(8,128)}', space=vmem, size = 0x2000, scoped, tag = 'scratch operand']
  %s0 = inlined_call_operand.hbm [shape: f32[16,128], index: 0, kind: input, shape index: {}]
  %s1 = inlined_call_operand.hbm [shape: f32[128,128], index: 1, kind: input, shape index: {}]
  %s2 = inlined_call_operand.hbm [shape: f32[128,128], index: 2, kind: input, shape index: {}]
  %s3 = inlined_call_operand.vmem [shape: f32[1,128], index: 3, kind: input, shape index: {}]
  %s4 = inlined_call_operand.hbm [shape: f32[16,128], index: 4, kind: output, shape index: {}]
  %s5 = sld [smem:[#allocation0]]
  $region46: #{tpu_custom_call.1} parent=0
    _
  %s7 = ssub.s32 1, %s5
  %s8 = scalar_select 0, %s7, %s5
  $region1: #{tpu_custom_call.1} parent=0
    #allocation3 [shape = 'u8[8192]{0}', space=vmem, size = 0x2000, scoped, tag = 'input window, operand 0, single buffered']
    #allocation4 [shape = 's32[1]{0}', space=sflag, size = 0x4, scoped, tag = 'scoped memory for tpu_custom_call.1']
    #allocation5 [shape = 's32[1]{0}', space=sflag, size = 0x4, scoped, tag = 'scoped memory for tpu_custom_call.1']
    #allocation6 [shape = 'u8[65536]{0}', space=vmem, size = 0x10000, scoped, tag = 'input window, operand 1, single buffered']
    #allocation7 [shape = 's32[1]{0}', space=sflag, size = 0x4, scoped, tag = 'scoped memory for tpu_custom_call.1']
    #allocation8 [shape = 'u8[65536]{0}', space=vmem, size = 0x10000, scoped, tag = 'input window, operand 2, single buffered']
    #allocation9 [shape = 'u8[8192]{0}', space=vmem, size = 0x2000, scoped, tag = 'output window, operand 0, single buffered']
    %9 = vsyncpa [#allocation4], 0
    %10 = vsyncpa [#allocation7], 0
    %11 = vsyncpa [#allocation5], 0
    // Predicated region
    $region2: #{tpu_custom_call.1} parent=1 // pred_check
      _
    $region3: #{tpu_custom_call.1} parent=1 // pred_check_branch
      %13 = sbr.rel (0) target = $region5
    $region4: #{tpu_custom_call.1} parent=1 // pred_region
      %s15 = ssub.s32 256, 256
      %16 = vsyncadd [#allocation4], %s15
      %s17 = sshll.u32 [#allocation3], 4
      %s18 = int_to_ptr.vmem [resolvable:$true] %s17
      %23 = dma.hbm_to_vmem [thread:$0]  %s0, 256, %s18, [#allocation4], 128, 128, 8
    $region5: #{tpu_custom_call.1} parent=1 // pred_fallthru
      _
    // Predicated region
    $region6: #{tpu_custom_call.1} parent=1 // pred_check
      _
    $region7: #{tpu_custom_call.1} parent=1 // pred_check_branch
      %25 = sbr.rel (0) target = $region9
    $region8: #{tpu_custom_call.1} parent=1 // pred_region
      %s27 = ssub.s32 2048, 2048
      %28 = vsyncadd [#allocation7], %s27
      %s29 = sshll.u32 [#allocation6], 4
      %s30 = int_to_ptr.vmem [resolvable:$true] %s29
      %35 = dma.hbm_to_vmem [thread:$0]  %s1, 2048, %s30, [#allocation7], 128, 128, 8
    $region9: #{tpu_custom_call.1} parent=1 // pred_fallthru
      _
    // Predicated region
    $region10: #{tpu_custom_call.1} parent=1 // pred_check
      _
    $region11: #{tpu_custom_call.1} parent=1 // pred_check_branch
      %37 = sbr.rel (0) target = $region13
    $region12: #{tpu_custom_call.1} parent=1 // pred_region
      %s39 = ssub.s32 2048, 2048
      %40 = vsyncadd [#allocation7], %s39
      %s41 = sshll.u32 [#allocation8], 4
      %s42 = int_to_ptr.vmem [resolvable:$true] %s41
      %47 = dma.hbm_to_vmem [thread:$0]  %s2, 2048, %s42, [#allocation7], 128, 128, 8
    $region13: #{tpu_custom_call.1} parent=1 // pred_fallthru
      _
    // Predicated region
    $region14: #{tpu_custom_call.1} parent=1 // pred_check
      _
    $region15: #{tpu_custom_call.1} parent=1 // pred_check_branch
      %49 = sbr.rel (0) target = $region17
    $region16: #{tpu_custom_call.1} parent=1 // pred_region
      _
    $region17: #{tpu_custom_call.1} parent=1 // pred_fallthru
      _
    // Predicated region
    $region18: #{tpu_custom_call.1} parent=1 // pred_check
      _
    $region19: #{tpu_custom_call.1} parent=1 // pred_check_branch
      %51 = sbr.rel (0) target = $region21
    $region20: #{tpu_custom_call.1} parent=1 // pred_region
      %52 = dma.done [#allocation4], 256
    $region21: #{tpu_custom_call.1} parent=1 // pred_fallthru
      _
    // Predicated region
    $region22: #{tpu_custom_call.1} parent=1 // pred_check
      _
    $region23: #{tpu_custom_call.1} parent=1 // pred_check_branch
      %54 = sbr.rel (0) target = $region25
    $region24: #{tpu_custom_call.1} parent=1 // pred_region
      %55 = dma.done [#allocation7], 2048
    $region25: #{tpu_custom_call.1} parent=1 // pred_fallthru
      _
    // Predicated region
    $region26: #{tpu_custom_call.1} parent=1 // pred_check
      _
    $region27: #{tpu_custom_call.1} parent=1 // pred_check_branch
      %57 = sbr.rel (0) target = $region29
    $region28: #{tpu_custom_call.1} parent=1 // pred_region
      %58 = dma.done [#allocation7], 2048
    $region29: #{tpu_custom_call.1} parent=1 // pred_fallthru
      _
    %p59 = scmp.eq.s32.totalorder 0, 0
    // Predicated region
    $region30: #{tpu_custom_call.1} parent=1 // pred_check
      %p60 = pneg %p59
    $region31: #{tpu_custom_call.1} parent=1 // pred_check_branch
      %62 = sbr.rel (%p60) target = $region33
    $region32: #{tpu_custom_call.1} parent=1 // pred_region
      %63 = vst [vmem:[#allocation2] sm:$0xff] 0.0
      %64 = vst [vmem:[#allocation2 + $0x8] sm:$0xff] 0.0
    $region33: #{tpu_custom_call.1} parent=1 // pred_fallthru
      _
    %v65 = vld [vmem:[#allocation2] sm:$0xff]
    %v66 = vld [vmem:[#allocation2 + $0x8] sm:$0xff]
    %v67 = vld [vmem:[#allocation3] sm:$0xff]
    %v68 = vld [vmem:[#allocation3 + $0x8] sm:$0xff]
    %v69 = vld [vmem:[#allocation6] sm:$0xff]
    %v70 = vld [vmem:[#allocation6 + $0x8] sm:$0xff]
    %v71 = vld [vmem:[#allocation6 + $0x10] sm:$0xff]
    %v72 = vld [vmem:[#allocation6 + $0x18] sm:$0xff]
    %v73 = vld [vmem:[#allocation6 + $0x20] sm:$0xff]
    %v74 = vld [vmem:[#allocation6 + $0x28] sm:$0xff]
    %v75 = vld [vmem:[#allocation6 + $0x30] sm:$0xff]
    %v76 = vld [vmem:[#allocation6 + $0x38] sm:$0xff]
    %v77 = vld [vmem:[#allocation6 + $0x40] sm:$0xff]
    %v78 = vld [vmem:[#allocation6 + $0x48] sm:$0xff]
    %v79 = vld [vmem:[#allocation6 + $0x50] sm:$0xff]
    %v80 = vld [vmem:[#allocation6 + $0x58] sm:$0xff]
    %v81 = vld [vmem:[#allocation6 + $0x60] sm:$0xff]
    %v82 = vld [vmem:[#allocation6 + $0x68] sm:$0xff]
    %v83 = vld [vmem:[#allocation6 + $0x70] sm:$0xff]
    %v84 = vld [vmem:[#allocation6 + $0x78] sm:$0xff]
    %85 = vmatprep.subr.mxu0 0.0
    %86 = vmatpush1.msra.mxu0 %v84
    %87 = vmatprep.subr.mxu0 0.0
    %88 = vmatpush1.msra.mxu0 %v83
    %89 = vmatprep.subr.mxu0 0.0
    %90 = vmatpush1.msra.mxu0 %v82
    %91 = vmatprep.subr.mxu0 0.0
    %92 = vmatpush1.msra.mxu0 %v81
    %93 = vmatprep.subr.mxu0 0.0
    %94 = vmatpush1.msra.mxu0 %v80
    %95 = vmatprep.subr.mxu0 0.0
    %96 = vmatpush1.msra.mxu0 %v79
    %97 = vmatprep.subr.mxu0 0.0
    %98 = vmatpush1.msra.mxu0 %v78
    %99 = vmatprep.subr.mxu0 0.0
    %100 = vmatpush1.msra.mxu0 %v77
    %101 = vmatprep.subr.mxu0 0.0
    %102 = vmatpush1.msra.mxu0 %v76
    %103 = vmatprep.subr.mxu0 0.0
    %104 = vmatpush1.msra.mxu0 %v75
    %105 = vmatprep.subr.mxu0 0.0
    %106 = vmatpush1.msra.mxu0 %v74
    %107 = vmatprep.subr.mxu0 0.0
    %108 = vmatpush1.msra.mxu0 %v73
    %109 = vmatprep.subr.mxu0 0.0
    %110 = vmatpush1.msra.mxu0 %v72
    %111 = vmatprep.subr.mxu0 0.0
    %112 = vmatpush1.msra.mxu0 %v71
    %113 = vmatprep.subr.mxu0 0.0
    %114 = vmatpush1.msra.mxu0 %v70
    %115 = vmatprep.subr.mxu0 0.0
    %116 = vmatpush1.msra.mxu0 %v69
    %117 = vmatprep.subr.mxu0 0.0
    %118 = vmatpush2.msra.mxu0 0.0
    %119 = vmatprep.subr.mxu0 0.0
    %120 = vmatpush2.msra.mxu0 0.0
    %121 = vmatprep.subr.mxu0 0.0
    %122 = vmatpush2.msra.mxu0 0.0
    %123 = vmatprep.subr.mxu0 0.0
    %124 = vmatpush2.msra.mxu0 0.0
    %125 = vmatprep.subr.mxu0 0.0
    %126 = vmatpush2.msra.mxu0 0.0
    %127 = vmatprep.subr.mxu0 0.0
    %128 = vmatpush2.msra.mxu0 0.0
    %129 = vmatprep.subr.mxu0 0.0
    %130 = vmatpush2.msra.mxu0 0.0
    %131 = vmatprep.subr.mxu0 0.0
    %132 = vmatpush2.msra.mxu0 0.0
    %133 = vmatprep.subr.mxu0 0.0
    %134 = vmatpush2.msra.mxu0 0.0
    %135 = vmatprep.subr.mxu0 0.0
    %136 = vmatpush2.msra.mxu0 0.0
    %137 = vmatprep.subr.mxu0 0.0
    %138 = vmatpush2.msra.mxu0 0.0
    %139 = vmatprep.subr.mxu0 0.0
    %140 = vmatpush2.msra.mxu0 0.0
    %141 = vmatprep.subr.mxu0 0.0
    %142 = vmatpush2.msra.mxu0 0.0
    %143 = vmatprep.subr.mxu0 0.0
    %144 = vmatpush2.msra.mxu0 0.0
    %145 = vmatprep.subr.mxu0 0.0
    %146 = vmatpush2.msra.mxu0 0.0
    %147 = vmatprep.subr.mxu0 0.0
    %148 = vmatpush2.msra.mxu0 0.0
    %149 = vmatprep.mubr.f32.mxu0 0.0
    %150 = vmatmul.mubr.f32.gmra.mxu0 %v67
    %v151 = vpop.f32.mrf.mxu0
    %v152 = vadd.f32 0.0, %v151
    %v153 = vpop.f32.mrf.mxu0
    %154 = vmatprep.mubr.f32.mxu0 0.0
    %155 = vmatmul.mubr.f32.gmra.mxu0 %v68
    %v156 = vpop.f32.mrf.mxu0
    %v157 = vadd.f32 0.0, %v156
    %v158 = vpop.f32.mrf.mxu0
    %159 = vdwg.mxu0
    %v160 = vadd.f32 %v65, %v152
    %v161 = vadd.f32 %v66, %v157
    %162 = vst [vmem:[#allocation2] sm:$0xff] %v160
    %163 = vst [vmem:[#allocation2 + $0x8] sm:$0xff] %v161
    // Predicated region
    $region34: #{tpu_custom_call.1} parent=1 // pred_check
      %p164 = pneg %p59
    $region35: #{tpu_custom_call.1} parent=1 // pred_check_branch
      %166 = sbr.rel (%p164) target = $region37
    $region36: #{tpu_custom_call.1} parent=1 // pred_region
      %v167 = vld [vmem:[#allocation2] sm:$0xff]
      %v168 = vld [vmem:[#allocation2 + $0x8] sm:$0xff]
      %v169 = vld [vmem:[#allocation8] sm:$0xff]
      %v170 = vld [vmem:[#allocation8 + $0x8] sm:$0xff]
      %v171 = vld [vmem:[#allocation8 + $0x10] sm:$0xff]
      %v172 = vld [vmem:[#allocation8 + $0x18] sm:$0xff]
      %v173 = vld [vmem:[#allocation8 + $0x20] sm:$0xff]
      %v174 = vld [vmem:[#allocation8 + $0x28] sm:$0xff]
      %v175 = vld [vmem:[#allocation8 + $0x30] sm:$0xff]
      %v176 = vld [vmem:[#allocation8 + $0x38] sm:$0xff]
      %v177 = vld [vmem:[#allocation8 + $0x40] sm:$0xff]
      %v178 = vld [vmem:[#allocation8 + $0x48] sm:$0xff]
      %v179 = vld [vmem:[#allocation8 + $0x50] sm:$0xff]
      %v180 = vld [vmem:[#allocation8 + $0x58] sm:$0xff]
      %v181 = vld [vmem:[#allocation8 + $0x60] sm:$0xff]
      %v182 = vld [vmem:[#allocation8 + $0x68] sm:$0xff]
      %v183 = vld [vmem:[#allocation8 + $0x70] sm:$0xff]
      %v184 = vld [vmem:[#allocation8 + $0x78] sm:$0xff]
      %v185 = vld [vmem:[%s3] sm:$0x1]
      %v187 = vlaneseq
      %v188 = vshrl.u32 %v187, 7
      %v189 = vsub.s32 0, %v188
      %v190 = vrot.slane %v185, %v189
      %192 = vmatprep.subr.mxu0 0.0
      %193 = vmatpush1.msra.mxu0 %v184
      %194 = vmatprep.subr.mxu0 0.0
      %195 = vmatpush1.msra.mxu0 %v183
      %196 = vmatprep.subr.mxu0 0.0
      %197 = vmatpush1.msra.mxu0 %v182
      %198 = vmatprep.subr.mxu0 0.0
      %199 = vmatpush1.msra.mxu0 %v181
      %200 = vmatprep.subr.mxu0 0.0
      %201 = vmatpush1.msra.mxu0 %v180
      %202 = vmatprep.subr.mxu0 0.0
      %203 = vmatpush1.msra.mxu0 %v179
      %204 = vmatprep.subr.mxu0 0.0
      %205 = vmatpush1.msra.mxu0 %v178
      %206 = vmatprep.subr.mxu0 0.0
      %207 = vmatpush1.msra.mxu0 %v177
      %208 = vmatprep.subr.mxu0 0.0
      %209 = vmatpush1.msra.mxu0 %v176
      %210 = vmatprep.subr.mxu0 0.0
      %211 = vmatpush1.msra.mxu0 %v175
      %212 = vmatprep.subr.mxu0 0.0
      %213 = vmatpush1.msra.mxu0 %v174
      %214 = vmatprep.subr.mxu0 0.0
      %215 = vmatpush1.msra.mxu0 %v173
      %216 = vmatprep.subr.mxu0 0.0
      %217 = vmatpush1.msra.mxu0 %v172
      %218 = vmatprep.subr.mxu0 0.0
      %219 = vmatpush1.msra.mxu0 %v171
      %220 = vmatprep.subr.mxu0 0.0
      %221 = vmatpush1.msra.mxu0 %v170
      %222 = vmatprep.subr.mxu0 0.0
      %223 = vmatpush1.msra.mxu0 %v169
      %224 = vmatprep.subr.mxu0 0.0
      %225 = vmatpush2.msra.mxu0 0.0
      %226 = vmatprep.subr.mxu0 0.0
      %227 = vmatpush2.msra.mxu0 0.0
      %228 = vmatprep.subr.mxu0 0.0
      %229 = vmatpush2.msra.mxu0 0.0
      %230 = vmatprep.subr.mxu0 0.0
      %231 = vmatpush2.msra.mxu0 0.0
      %232 = vmatprep.subr.mxu0 0.0
      %233 = vmatpush2.msra.mxu0 0.0
      %234 = vmatprep.subr.mxu0 0.0
      %235 = vmatpush2.msra.mxu0 0.0
      %236 = vmatprep.subr.mxu0 0.0
      %237 = vmatpush2.msra.mxu0 0.0
      %238 = vmatprep.subr.mxu0 0.0
      %239 = vmatpush2.msra.mxu0 0.0
      %240 = vmatprep.subr.mxu0 0.0
      %241 = vmatpush2.msra.mxu0 0.0
      %242 = vmatprep.subr.mxu0 0.0
      %243 = vmatpush2.msra.mxu0 0.0
      %244 = vmatprep.subr.mxu0 0.0
      %245 = vmatpush2.msra.mxu0 0.0
      %246 = vmatprep.subr.mxu0 0.0
      %247 = vmatpush2.msra.mxu0 0.0
      %248 = vmatprep.subr.mxu0 0.0
      %249 = vmatpush2.msra.mxu0 0.0
      %250 = vmatprep.subr.mxu0 0.0
      %251 = vmatpush2.msra.mxu0 0.0
      %252 = vmatprep.subr.mxu0 0.0
      %253 = vmatpush2.msra.mxu0 0.0
      %254 = vmatprep.subr.mxu0 0.0
      %255 = vmatpush2.msra.mxu0 0.0
      %256 = vmatprep.mubr.f32.mxu0 0.0
      %257 = vmatmul.mubr.f32.gmra.mxu0 %v167
      %v258 = vpop.f32.mrf.mxu0
      %v259 = vadd.f32 %v190, %v258
      %v260 = vpop.f32.mrf.mxu0
      %261 = vmatprep.mubr.f32.mxu0 0.0
      %262 = vmatmul.mubr.f32.gmra.mxu0 %v168
      %v263 = vpop.f32.mrf.mxu0
      %v264 = vadd.f32 %v190, %v263
      %v265 = vpop.f32.mrf.mxu0
      %266 = vdwg.mxu0
      %267 = vst [vmem:[#allocation9] sm:$0xff] %v259
      %268 = vst [vmem:[#allocation9 + $0x8] sm:$0xff] %v264
    $region37: #{tpu_custom_call.1} parent=1 // pred_fallthru
      _
    // Predicated region
    $region38: #{tpu_custom_call.1} parent=1 // pred_check
      _
    $region39: #{tpu_custom_call.1} parent=1 // pred_check_branch
      %270 = sbr.rel (0) target = $region41
    $region40: #{tpu_custom_call.1} parent=1 // pred_region
      %s272 = ssub.s32 256, 256
      %273 = vsyncadd [#allocation5], %s272
      %s274 = sshll.u32 [#allocation9], 4
      %s275 = int_to_ptr.vmem [resolvable:$true] %s274
      %280 = dma.vmem_to_hbm [thread:$0]  %s275, 256, %s4, [#allocation5], 128, 128, 8
    $region41: #{tpu_custom_call.1} parent=1 // pred_fallthru
      _
    // Predicated region
    $region42: #{tpu_custom_call.1} parent=1 // pred_check
      _
    $region43: #{tpu_custom_call.1} parent=1 // pred_check_branch
      %282 = sbr.rel (0) target = $region45
    $region44: #{tpu_custom_call.1} parent=1 // pred_region
      %283 = dma.done [#allocation5], 256
    $region45: #{tpu_custom_call.1} parent=1 // pred_fallthru
      _
    %284 = vsyncpa [#allocation4], 1
    %285 = vsyncpa [#allocation7], 1
    %286 = vsyncpa [#allocation5], 1

</llo_original>
